<compile_context>
chip_gen: v7x
topology: tpu7x:2x2x1
jax: 0.10.0
libtpu: 0.0.40
codegen_flags: <defaults>
</compile_context>

<pallas_src>
import functools

import jax
import jax.numpy as jnp
from jax import lax
from jax.experimental import pallas as pl
from jax.experimental.pallas import tpu as pltpu


def _silu(x):
    return x * jax.nn.sigmoid(x)


def _round_up(x, m):
    return ((x + m - 1) // m) * m


def _pad2(a, rows, cols):
    """Zero-pad a 2-D array up to (rows, cols)."""
    out = jnp.zeros((rows, cols), a.dtype)
    return out.at[: a.shape[0], : a.shape[1]].set(a)


# ---------------------------------------------------------------------------
# Kernel
# ---------------------------------------------------------------------------
def edge_block_kernel(coeff, compute_dtype,
                      rows_ref,                              # per-tile packed rows
                      off_ref, w1_ref, b1_ref,               # resident params
                      stab_ref, ttab_ref, w2_ref, b2_ref,
                      out_ref):
    """One grid step processes a (TILE_E, *) slab of edges.

    rows_ref : [T, 3]      i32   col0 = bitcast(f32 distance), col1 = src id, col2 = tgt id
    off_ref  : [1, Dp]     f32   gaussian centers (padded)
    w1_ref   : [Dp, Cp]    cdt   fc1_dist weight, pre-transposed (x @ W)
    b1_ref   : [1, Cp]     f32
    stab_ref : [Mp, Cp]    cdt   source embedding table (padded)
    ttab_ref : [Mp, Cp]    cdt   target embedding table (padded)
    w2_ref   : [Cp, Cp]    cdt   fc1_edge_attr weight, pre-transposed
    b2_ref   : [1, Cp]     f32
    out_ref  : [T, Cp]
    """
    T = rows_ref.shape[0]
    Mp = stab_ref.shape[0]

    # Unpack the fused per-edge scalar columns.
    dist = pltpu.bitcast(rows_ref[:, 0:1], jnp.float32)       # [T, 1] f32
    src_i = rows_ref[:, 1:2]                                   # [T, 1] i32
    tgt_i = rows_ref[:, 2:3]                                   # [T, 1] i32

    # Gaussian smearing: exp(coeff * (d - mu)^2), coeff < 0.  (f32 VPU/EUP)
    diff = dist - off_ref[...]                                 # [T, Dp]
    x_exp = jnp.exp(coeff * diff * diff)

    # Embedding gather as one-hot matmuls against VMEM-resident tables (MXU).
    lane_ids = lax.broadcasted_iota(jnp.int32, (T, Mp), 1)
    oh_src = (lane_ids == src_i).astype(compute_dtype)         # [T, Mp]
    oh_tgt = (lane_ids == tgt_i).astype(compute_dtype)

    # fc1_dist + src_emb + tgt_emb + bias, all accumulated in f32.
    pre = (jnp.dot(x_exp.astype(compute_dtype), w1_ref[...],
                   preferred_element_type=jnp.float32)
           + jnp.dot(oh_src, stab_ref[...], preferred_element_type=jnp.float32)
           + jnp.dot(oh_tgt, ttab_ref[...], preferred_element_type=jnp.float32)
           + b1_ref[...])

    # combine + SiLU (f32 elementwise)
    x_edge = _silu(pre)                                        # [T, Cp]

    # fc1_edge_attr + SiLU
    y = jnp.dot(x_edge.astype(compute_dtype), w2_ref[...],
                preferred_element_type=jnp.float32) + b2_ref[...]
    out_ref[...] = _silu(y).astype(out_ref.dtype)


# ---------------------------------------------------------------------------
# One-time parameter preparation (hoisted out of the per-call path):
# transpose, lane-pad to multiples of 128, cast matmul operands.
# ---------------------------------------------------------------------------
def prepare_params(params, *, compute_dtype=jnp.float32):
    w1, b1 = params["fc1_dist_w"], params["fc1_dist_b"]            # [C, Din], [C]
    w2, b2 = params["fc1_edge_attr_w"], params["fc1_edge_attr_b"]  # [C, C],   [C]
    stab, ttab = params["source_embedding"], params["target_embedding"]
    offsets = params["offsets"]

    C, Din = w1.shape
    M = stab.shape[0]
    Cp = _round_up(C, 128)
    Dp = _round_up(Din, 128)
    Mp = _round_up(M, 128)

    return {
        "coeff": float(params["coeff"]),     # static; pass via SMEM if it varied at runtime
        "compute_dtype": compute_dtype,
        "C": C, "Cp": Cp, "Dp": Dp, "Mp": Mp,
        "offsets": _pad2(offsets.reshape(1, -1).astype(jnp.float32), 1, Dp),
        "w1t": _pad2(w1.T.astype(jnp.float32), Dp, Cp).astype(compute_dtype),
        "b1": _pad2(b1.reshape(1, -1).astype(jnp.float32), 1, Cp),
        "src_tab": _pad2(stab.astype(jnp.float32), Mp, Cp).astype(compute_dtype),
        "tgt_tab": _pad2(ttab.astype(jnp.float32), Mp, Cp).astype(compute_dtype),
        "w2t": _pad2(w2.T.astype(jnp.float32), Cp, Cp).astype(compute_dtype),
        "b2": _pad2(b2.reshape(1, -1).astype(jnp.float32), 1, Cp),
    }


# ---------------------------------------------------------------------------
# Forward wrapper
# ---------------------------------------------------------------------------
def edge_block_forward(edge_distance, source_element, target_element, prep,
                       *, tile_e=1024, out_dtype=jnp.float32):
    C, Cp, Dp, Mp = prep["C"], prep["Cp"], prep["Dp"], prep["Mp"]
    coeff = prep["coeff"]
    cdt = prep["compute_dtype"]

    E = edge_distance.shape[0]
    tile = min(tile_e, _round_up(E, 8))          # multiple of 8 (sublane)
    E_p = _round_up(E, tile)

    # Pack the three per-edge scalar streams into one int32 [E_p, 3] array
    # (distance is bitcast f32 -> i32; padded rows are independent, sliced off).
    dist_bits = lax.bitcast_convert_type(edge_distance.astype(jnp.float32),
                                         jnp.int32)
    rows = jnp.stack([dist_bits,
                      source_element.astype(jnp.int32),
                      target_element.astype(jnp.int32)], axis=1)       # [E, 3]
    rows_p = jnp.zeros((E_p, 3), jnp.int32).at[:E].set(rows)

    row_spec = pl.BlockSpec((tile, 3), lambda i: (i, 0))
    resident = lambda shape: pl.BlockSpec(shape, lambda i: (0, 0))  # stays in VMEM

    out_p = pl.pallas_call(
        functools.partial(edge_block_kernel, coeff, cdt),
        out_shape=jax.ShapeDtypeStruct((E_p, Cp), out_dtype),
        grid=(E_p // tile,),
        in_specs=[
            row_spec,                           # packed [dist | src | tgt]
            resident((1, Dp)),                  # gaussian offsets
            resident((Dp, Cp)),                 # w1^T
            resident((1, Cp)),                  # b1
            resident((Mp, Cp)),                 # source embedding table
            resident((Mp, Cp)),                 # target embedding table
            resident((Cp, Cp)),                 # w2^T
            resident((1, Cp)),                  # b2
        ],
        out_specs=pl.BlockSpec((tile, Cp), lambda i: (i, 0)),
        compiler_params=pltpu.CompilerParams(
            dimension_semantics=("parallel",)),
    )(rows_p,
      prep["offsets"], prep["w1t"], prep["b1"],
      prep["src_tab"], prep["tgt_tab"], prep["w2t"], prep["b2"])

    return out_p[:E, :C]


# ---------------------------------------------------------------------------
# Synthetic parameter init (shapes follow EdgeBlock.__init__)
# ---------------------------------------------------------------------------
def init_params(key, *, edge_channels, num_gaussians, max_num_elements, cutoff=6.0):
    k1, k2, k3, k4, k5, k6 = jax.random.split(key, 6)
    C, Din = edge_channels, num_gaussians

    # GaussianSmearing(start=0.0, stop=cutoff, num_gaussians=Din)
    offsets = jnp.linspace(0.0, cutoff, Din, dtype=jnp.float32)
    coeff = -0.5 / float(offsets[1] - offsets[0]) ** 2

    def linear_init(kw, kb, fan_in, shape_w, shape_b):
        bound = 1.0 / jnp.sqrt(fan_in)
        w = jax.random.uniform(kw, shape_w, jnp.float32, -bound, bound)
        b = jax.random.uniform(kb, shape_b, jnp.float32, -bound, bound)
        return w, b

    fc1_dist_w, fc1_dist_b = linear_init(k1, k2, Din, (C, Din), (C,))
    fc1_edge_w, fc1_edge_b = linear_init(k3, k4, C, (C, C), (C,))

    src_emb = jax.random.uniform(k5, (max_num_elements, C), jnp.float32, -0.001, 0.001)
    tgt_emb = jax.random.uniform(k6, (max_num_elements, C), jnp.float32, -0.001, 0.001)

    return {
        "offsets": offsets,
        "coeff": coeff,
        "fc1_dist_w": fc1_dist_w,
        "fc1_dist_b": fc1_dist_b,
        "fc1_edge_attr_w": fc1_edge_w,
        "fc1_edge_attr_b": fc1_edge_b,
        "source_embedding": src_emb,
        "target_embedding": tgt_emb,
    }


def _reference(edge_distance, source_element, target_element, params):
    """Pure-JAX reference."""
    off = params["offsets"]
    d = edge_distance[:, None] - off[None, :]
    x = jnp.exp(params["coeff"] * d * d)
    x = x @ params["fc1_dist_w"].T + params["fc1_dist_b"]
    s = params["source_embedding"][source_element]
    t = params["target_embedding"][target_element]
    xe = _silu(s + t + x)
    return _silu(xe @ params["fc1_edge_attr_w"].T + params["fc1_edge_attr_b"])


if __name__ == "__main__":
    C = 32               # edge_channels
    DIN = 32             # distance_expansion.num_output (num gaussians)
    MAX_ELEM = 8         # max_num_elements

    key = jax.random.PRNGKey(0)
    kp, kd, ks, kt = jax.random.split(key, 4)

    params = init_params(kp, edge_channels=C, num_gaussians=DIN,
                         max_num_elements=MAX_ELEM)
    prep_f32 = prepare_params(params, compute_dtype=jnp.float32)

    # --- small single-tile check (E=16), f32 ------------------------------
    E = 16
    edge_distance = jax.random.uniform(kd, (E,), jnp.float32, 0.1, 6.0)
    source_element = jax.random.randint(ks, (E,), 0, MAX_ELEM, jnp.int32)
    target_element = jax.random.randint(kt, (E,), 0, MAX_ELEM, jnp.int32)

    out = edge_block_forward(edge_distance, source_element, target_element, prep_f32)
    out = jax.block_until_ready(out)
    ref = _reference(edge_distance, source_element, target_element, params)
    assert out.shape == (E, C)
    assert jnp.allclose(out, ref, atol=1e-5, rtol=1e-5)

    # --- multi-tile grid + ragged edge count (E=300, tile=128), f32 -------
    E2 = 300
    kd2, ks2, kt2 = jax.random.split(jax.random.PRNGKey(1), 3)
    d2 = jax.random.uniform(kd2, (E2,), jnp.float32, 0.1, 6.0)
    s2 = jax.random.randint(ks2, (E2,), 0, MAX_ELEM, jnp.int32)
    t2 = jax.random.randint(kt2, (E2,), 0, MAX_ELEM, jnp.int32)
    out2 = jax.block_until_ready(
        edge_block_forward(d2, s2, t2, prep_f32, tile_e=128))
    ref2 = _reference(d2, s2, t2, params)
    assert out2.shape == (E2, C)
    assert jnp.allclose(out2, ref2, atol=1e-5, rtol=1e-5)

    # --- bf16 MXU operands + bf16 writeback (v6e/v7x fast path) -----------
    prep_bf16 = prepare_params(params, compute_dtype=jnp.bfloat16)
    out3 = jax.block_until_ready(
        edge_block_forward(d2, s2, t2, prep_bf16, tile_e=128,
                           out_dtype=jnp.bfloat16))
    assert out3.shape == (E2, C)
    assert jnp.allclose(out3.astype(jnp.float32), ref2, atol=3e-2, rtol=3e-2)

    print("KERNEL_OK")
</pallas_src>

<mosaic_0001>
module attributes {stable_mosaic.version = 11 : i64} {
  func.func @edge_block_kernel(%arg0: i32, %arg1: memref<16x3xi32, #tpu.memory_space<vmem>>, %arg2: memref<1x128xf32, #tpu.memory_space<vmem>>, %arg3: memref<128x128xf32, #tpu.memory_space<vmem>>, %arg4: memref<1x128xf32, #tpu.memory_space<vmem>>, %arg5: memref<128x128xf32, #tpu.memory_space<vmem>>, %arg6: memref<128x128xf32, #tpu.memory_space<vmem>>, %arg7: memref<128x128xf32, #tpu.memory_space<vmem>>, %arg8: memref<1x128xf32, #tpu.memory_space<vmem>>, %arg9: memref<16x128xf32, #tpu.memory_space<vmem>>) attributes {dimension_semantics = [#tpu.dimension_semantics<parallel>], iteration_bounds = array<i64: 1>, scalar_prefetch = 0 : i64, scratch_operands = 0 : i64, tpu.core_type = #tpu.core_type<tc>, window_params = [{transform_indices = @transform_0, window_bounds = array<i64: 16, 3>}, {pipeline_mode = #tpu.pipeline_mode<synchronous>, transform_indices = @transform_1, window_bounds = array<i64: 1, 128>}, {pipeline_mode = #tpu.pipeline_mode<synchronous>, transform_indices = @transform_2, window_bounds = array<i64: 128, 128>}, {pipeline_mode = #tpu.pipeline_mode<synchronous>, transform_indices = @transform_3, window_bounds = array<i64: 1, 128>}, {pipeline_mode = #tpu.pipeline_mode<synchronous>, transform_indices = @transform_4, window_bounds = array<i64: 128, 128>}, {pipeline_mode = #tpu.pipeline_mode<synchronous>, transform_indices = @transform_5, window_bounds = array<i64: 128, 128>}, {pipeline_mode = #tpu.pipeline_mode<synchronous>, transform_indices = @transform_6, window_bounds = array<i64: 128, 128>}, {pipeline_mode = #tpu.pipeline_mode<synchronous>, transform_indices = @transform_7, window_bounds = array<i64: 1, 128>}, {transform_indices = @transform_8, window_bounds = array<i64: 16, 128>}]} {
    %c0 = arith.constant 0 : index
    %c0_0 = arith.constant 0 : index
    %0 = vector.load %arg1[%c0, %c0_0] : memref<16x3xi32, #tpu.memory_space<vmem>>, vector<16x1xi32>
    %1 = tpu.bitcast %0 : vector<16x1xi32> -> vector<16x1xf32>
    %c0_1 = arith.constant 0 : index
    %c1 = arith.constant 1 : index
    %2 = vector.load %arg1[%c0_1, %c1] : memref<16x3xi32, #tpu.memory_space<vmem>>, vector<16x1xi32>
    %c0_2 = arith.constant 0 : index
    %c2 = arith.constant 2 : index
    %3 = vector.load %arg1[%c0_2, %c2] : memref<16x3xi32, #tpu.memory_space<vmem>>, vector<16x1xi32>
    %c0_3 = arith.constant 0 : index
    %c0_4 = arith.constant 0 : index
    %4 = vector.load %arg2[%c0_3, %c0_4] : memref<1x128xf32, #tpu.memory_space<vmem>>, vector<1x128xf32>
    %5 = vector.broadcast %1 : vector<16x1xf32> to vector<16x128xf32>
    %6 = vector.broadcast %4 : vector<1x128xf32> to vector<16x128xf32>
    %7 = arith.subf %5, %6 : vector<16x128xf32>
    %cst = arith.constant -13.3472233 : f32
    %8 = vector.broadcast %cst : f32 to vector<16x128xf32>
    %9 = arith.mulf %8, %7 : vector<16x128xf32>
    %10 = arith.mulf %9, %7 : vector<16x128xf32>
    %11 = math.exp %10 : vector<16x128xf32>
    %12 = tpu.iota {dimensions = array<i32: 1>} : vector<16x128xi32>
    %13 = vector.broadcast %2 : vector<16x1xi32> to vector<16x128xi32>
    %14 = arith.cmpi eq, %12, %13 : vector<16x128xi32>
    %15 = arith.extui %14 : vector<16x128xi1> to vector<16x128xi32>
    %16 = arith.sitofp %15 : vector<16x128xi32> to vector<16x128xf32>
    %17 = vector.broadcast %3 : vector<16x1xi32> to vector<16x128xi32>
    %18 = arith.cmpi eq, %12, %17 : vector<16x128xi32>
    %19 = arith.extui %18 : vector<16x128xi1> to vector<16x128xi32>
    %20 = arith.sitofp %19 : vector<16x128xi32> to vector<16x128xf32>
    %c0_5 = arith.constant 0 : index
    %c0_6 = arith.constant 0 : index
    %21 = vector.load %arg3[%c0_5, %c0_6] : memref<128x128xf32, #tpu.memory_space<vmem>>, vector<128x128xf32>
    %cst_7 = arith.constant dense<0.000000e+00> : vector<16x128xf32>
    %22 = tpu.matmul %11, %21, %cst_7 {dimension_numbers = #tpu.dot_dimension_numbers<[1], [0], [0], [1], [0, 0, 1, 1], [], []>} : vector<16x128xf32>, vector<128x128xf32>, vector<16x128xf32> -> vector<16x128xf32>
    %c0_8 = arith.constant 0 : index
    %c0_9 = arith.constant 0 : index
    %23 = vector.load %arg5[%c0_8, %c0_9] : memref<128x128xf32, #tpu.memory_space<vmem>>, vector<128x128xf32>
    %cst_10 = arith.constant dense<0.000000e+00> : vector<16x128xf32>
    %24 = tpu.matmul %16, %23, %cst_10 {dimension_numbers = #tpu.dot_dimension_numbers<[1], [0], [0], [1], [0, 0, 1, 1], [], []>} : vector<16x128xf32>, vector<128x128xf32>, vector<16x128xf32> -> vector<16x128xf32>
    %25 = arith.addf %22, %24 : vector<16x128xf32>
    %c0_11 = arith.constant 0 : index
    %c0_12 = arith.constant 0 : index
    %26 = vector.load %arg6[%c0_11, %c0_12] : memref<128x128xf32, #tpu.memory_space<vmem>>, vector<128x128xf32>
    %cst_13 = arith.constant dense<0.000000e+00> : vector<16x128xf32>
    %27 = tpu.matmul %20, %26, %cst_13 {dimension_numbers = #tpu.dot_dimension_numbers<[1], [0], [0], [1], [0, 0, 1, 1], [], []>} : vector<16x128xf32>, vector<128x128xf32>, vector<16x128xf32> -> vector<16x128xf32>
    %28 = arith.addf %25, %27 : vector<16x128xf32>
    %c0_14 = arith.constant 0 : index
    %c0_15 = arith.constant 0 : index
    %29 = vector.load %arg4[%c0_14, %c0_15] : memref<1x128xf32, #tpu.memory_space<vmem>>, vector<1x128xf32>
    %30 = vector.broadcast %29 : vector<1x128xf32> to vector<16x128xf32>
    %31 = arith.addf %28, %30 : vector<16x128xf32>
    %32 = arith.negf %31 : vector<16x128xf32>
    %33 = math.exp %32 : vector<16x128xf32>
    %cst_16 = arith.constant 1.000000e+00 : f32
    %34 = vector.broadcast %cst_16 : f32 to vector<16x128xf32>
    %35 = arith.addf %34, %33 : vector<16x128xf32>
    %36 = arith.divf %34, %35 : vector<16x128xf32>
    %37 = arith.mulf %31, %36 : vector<16x128xf32>
    %c0_17 = arith.constant 0 : index
    %c0_18 = arith.constant 0 : index
    %38 = vector.load %arg7[%c0_17, %c0_18] : memref<128x128xf32, #tpu.memory_space<vmem>>, vector<128x128xf32>
    %cst_19 = arith.constant dense<0.000000e+00> : vector<16x128xf32>
    %39 = tpu.matmul %37, %38, %cst_19 {dimension_numbers = #tpu.dot_dimension_numbers<[1], [0], [0], [1], [0, 0, 1, 1], [], []>} : vector<16x128xf32>, vector<128x128xf32>, vector<16x128xf32> -> vector<16x128xf32>
    %c0_20 = arith.constant 0 : index
    %c0_21 = arith.constant 0 : index
    %40 = vector.load %arg8[%c0_20, %c0_21] : memref<1x128xf32, #tpu.memory_space<vmem>>, vector<1x128xf32>
    %41 = vector.broadcast %40 : vector<1x128xf32> to vector<16x128xf32>
    %42 = arith.addf %39, %41 : vector<16x128xf32>
    %43 = arith.negf %42 : vector<16x128xf32>
    %44 = math.exp %43 : vector<16x128xf32>
    %cst_22 = arith.constant 1.000000e+00 : f32
    %45 = vector.broadcast %cst_22 : f32 to vector<16x128xf32>
    %46 = arith.addf %45, %44 : vector<16x128xf32>
    %47 = arith.divf %45, %46 : vector<16x128xf32>
    %48 = arith.mulf %42, %47 : vector<16x128xf32>
    %c0_23 = arith.constant 0 : index
    %c0_24 = arith.constant 0 : index
    %49 = vector.load %arg9[%c0_23, %c0_24] : memref<16x128xf32, #tpu.memory_space<vmem>>, vector<16x128xf32>
    tpu.vector_store %arg9[%c0_23, %c0_24], %48 {strides = array<i32>} : memref<16x128xf32, #tpu.memory_space<vmem>>, vector<16x128xf32>,
    return
  }
  func.func @transform_0(%arg0: i32) -> (i32, i32) {
    %c0_i32 = arith.constant 0 : i32
    %c0_i32_0 = arith.constant 0 : i32
    return %arg0, %c0_i32 : i32, i32
  }
  func.func @transform_1(%arg0: i32) -> (i32, i32) {
    %c0_i32 = arith.constant 0 : i32
    %c0_i32_0 = arith.constant 0 : i32
    %c0_i32_1 = arith.constant 0 : i32
    return %c0_i32, %c0_i32_0 : i32, i32
  }
  func.func @transform_2(%arg0: i32) -> (i32, i32) {
    %c0_i32 = arith.constant 0 : i32
    %c0_i32_0 = arith.constant 0 : i32
    %c0_i32_1 = arith.constant 0 : i32
    return %c0_i32, %c0_i32_0 : i32, i32
  }
  func.func @transform_3(%arg0: i32) -> (i32, i32) {
    %c0_i32 = arith.constant 0 : i32
    %c0_i32_0 = arith.constant 0 : i32
    %c0_i32_1 = arith.constant 0 : i32
    return %c0_i32, %c0_i32_0 : i32, i32
  }
  func.func @transform_4(%arg0: i32) -> (i32, i32) {
    %c0_i32 = arith.constant 0 : i32
    %c0_i32_0 = arith.constant 0 : i32
    %c0_i32_1 = arith.constant 0 : i32
    return %c0_i32, %c0_i32_0 : i32, i32
  }
  func.func @transform_5(%arg0: i32) -> (i32, i32) {
    %c0_i32 = arith.constant 0 : i32
    %c0_i32_0 = arith.constant 0 : i32
    %c0_i32_1 = arith.constant 0 : i32
    return %c0_i32, %c0_i32_0 : i32, i32
  }
  func.func @transform_6(%arg0: i32) -> (i32, i32) {
    %c0_i32 = arith.constant 0 : i32
    %c0_i32_0 = arith.constant 0 : i32
    %c0_i32_1 = arith.constant 0 : i32
    return %c0_i32, %c0_i32_0 : i32, i32
  }
  func.func @transform_7(%arg0: i32) -> (i32, i32) {
    %c0_i32 = arith.constant 0 : i32
    %c0_i32_0 = arith.constant 0 : i32
    %c0_i32_1 = arith.constant 0 : i32
    return %c0_i32, %c0_i32_0 : i32, i32
  }
  func.func @transform_8(%arg0: i32) -> (i32, i32) {
    %c0_i32 = arith.constant 0 : i32
    %c0_i32_0 = arith.constant 0 : i32
    return %arg0, %c0_i32 : i32, i32
  }
}

</mosaic_0001>

<llo_original>
// kernel: tpu_custom_call.1
$region0: #{tpu_custom_call.1}
  #allocation0 [shape = 'u32[]', space=smem, size = 0x4, offset = 0x4, fixed_abs, tag = 'smem constant byte address 0x4 - core index']
  #allocation1 [shape = 'u32[144,128]{1,0:T(1,128)}', space=vmem, size = 0x12000, scoped, tag = 'internal scratch']
  %s0 = inlined_call_operand.vmem [shape: s32[16,3], index: 0, kind: input, shape index: {}]
  %s1 = inlined_call_operand.vmem [shape: f32[1,128], index: 1, kind: input, shape index: {}]
  %s2 = inlined_call_operand.hbm [shape: f32[128,128], index: 2, kind: input, shape index: {}]
  %s3 = inlined_call_operand.vmem [shape: f32[1,128], index: 3, kind: input, shape index: {}]
  %s4 = inlined_call_operand.hbm [shape: f32[128,128], index: 4, kind: input, shape index: {}]
  %s5 = inlined_call_operand.hbm [shape: f32[128,128], index: 5, kind: input, shape index: {}]
  %s6 = inlined_call_operand.hbm [shape: f32[128,128], index: 6, kind: input, shape index: {}]
  %s7 = inlined_call_operand.vmem [shape: f32[1,128], index: 7, kind: input, shape index: {}]
  %s8 = inlined_call_operand.hbm [shape: f32[16,128], index: 8, kind: output, shape index: {}]
  %s9 = sld [smem:[#allocation0]]
  $region58: #{tpu_custom_call.1} parent=0
    _
  %s11 = ssub.s32 1, %s9
  %s12 = scalar_select 0, %s11, %s9
  $region1: #{tpu_custom_call.1} parent=0
    #allocation2 [shape = 'u8[65536]{0}', space=vmem, size = 0x10000, scoped, tag = 'input window, operand 2, single buffered']
    #allocation3 [shape = 's32[1]{0}', space=sflag, size = 0x4, scoped, tag = 'scoped memory for tpu_custom_call.1']
    #allocation4 [shape = 's32[1]{0}', space=sflag, size = 0x4, scoped, tag = 'scoped memory for tpu_custom_call.1']
    #allocation5 [shape = 'u8[65536]{0}', space=vmem, size = 0x10000, scoped, tag = 'input window, operand 4, single buffered']
    #allocation6 [shape = 's32[1]{0}', space=sflag, size = 0x4, scoped, tag = 'scoped memory for tpu_custom_call.1']
    #allocation7 [shape = 'u8[65536]{0}', space=vmem, size = 0x10000, scoped, tag = 'input window, operand 5, single buffered']
    #allocation8 [shape = 'u8[65536]{0}', space=vmem, size = 0x10000, scoped, tag = 'input window, operand 6, single buffered']
    #allocation9 [shape = 's32[1]{0}', space=sflag, size = 0x4, scoped, tag = 'scoped memory for tpu_custom_call.1']
    #allocation10 [shape = 'u8[8192]{0}', space=vmem, size = 0x2000, scoped, tag = 'output window, operand 0, single buffered']
    %13 = vsyncpa [#allocation3], 0
    %14 = vsyncpa [#allocation6], 0
    %15 = vsyncpa [#allocation9], 0
    %16 = vsyncpa [#allocation4], 0
    // Predicated region
    $region2: #{tpu_custom_call.1} parent=1 // pred_check
      _
    $region3: #{tpu_custom_call.1} parent=1 // pred_check_branch
      %18 = sbr.rel (0) target = $region5
    $region4: #{tpu_custom_call.1} parent=1 // pred_region
      _
    $region5: #{tpu_custom_call.1} parent=1 // pred_fallthru
      _
    // Predicated region
    $region6: #{tpu_custom_call.1} parent=1 // pred_check
      _
    $region7: #{tpu_custom_call.1} parent=1 // pred_check_branch
      %20 = sbr.rel (0) target = $region9
    $region8: #{tpu_custom_call.1} parent=1 // pred_region
      _
    $region9: #{tpu_custom_call.1} parent=1 // pred_fallthru
      _
    // Predicated region
    $region10: #{tpu_custom_call.1} parent=1 // pred_check
      _
    $region11: #{tpu_custom_call.1} parent=1 // pred_check_branch
      %22 = sbr.rel (0) target = $region13
    $region12: #{tpu_custom_call.1} parent=1 // pred_region
      %s24 = ssub.s32 2048, 2048
      %25 = vsyncadd [#allocation3], %s24
      %s26 = sshll.u32 [#allocation2], 4
      %s27 = int_to_ptr.vmem [resolvable:$true] %s26
      %32 = dma.hbm_to_vmem [thread:$0]  %s2, 2048, %s27, [#allocation3], 128, 128, 8
    $region13: #{tpu_custom_call.1} parent=1 // pred_fallthru
      _
    // Predicated region
    $region14: #{tpu_custom_call.1} parent=1 // pred_check
      _
    $region15: #{tpu_custom_call.1} parent=1 // pred_check_branch
      %34 = sbr.rel (0) target = $region17
    $region16: #{tpu_custom_call.1} parent=1 // pred_region
      _
    $region17: #{tpu_custom_call.1} parent=1 // pred_fallthru
      _
    // Predicated region
    $region18: #{tpu_custom_call.1} parent=1 // pred_check
      _
    $region19: #{tpu_custom_call.1} parent=1 // pred_check_branch
      %36 = sbr.rel (0) target = $region21
    $region20: #{tpu_custom_call.1} parent=1 // pred_region
      %s38 = ssub.s32 2048, 2048
      %39 = vsyncadd [#allocation6], %s38
      %s40 = sshll.u32 [#allocation5], 4
      %s41 = int_to_ptr.vmem [resolvable:$true] %s40
      %46 = dma.hbm_to_vmem [thread:$0]  %s4, 2048, %s41, [#allocation6], 128, 128, 8
    $region21: #{tpu_custom_call.1} parent=1 // pred_fallthru
      _
    // Predicated region
    $region22: #{tpu_custom_call.1} parent=1 // pred_check
      _
    $region23: #{tpu_custom_call.1} parent=1 // pred_check_branch
      %48 = sbr.rel (0) target = $region25
    $region24: #{tpu_custom_call.1} parent=1 // pred_region
      %s50 = ssub.s32 2048, 2048
      %51 = vsyncadd [#allocation6], %s50
      %s52 = sshll.u32 [#allocation7], 4
      %s53 = int_to_ptr.vmem [resolvable:$true] %s52
      %58 = dma.hbm_to_vmem [thread:$0]  %s5, 2048, %s53, [#allocation6], 128, 128, 8
    $region25: #{tpu_custom_call.1} parent=1 // pred_fallthru
      _
    // Predicated region
    $region26: #{tpu_custom_call.1} parent=1 // pred_check
      _
    $region27: #{tpu_custom_call.1} parent=1 // pred_check_branch
      %60 = sbr.rel (0) target = $region29
    $region28: #{tpu_custom_call.1} parent=1 // pred_region
      %s62 = ssub.s32 2048, 2048
      %63 = vsyncadd [#allocation9], %s62
      %s64 = sshll.u32 [#allocation8], 4
      %s65 = int_to_ptr.vmem [resolvable:$true] %s64
      %70 = dma.hbm_to_vmem [thread:$0]  %s6, 2048, %s65, [#allocation9], 128, 128, 8
    $region29: #{tpu_custom_call.1} parent=1 // pred_fallthru
      _
    // Predicated region
    $region30: #{tpu_custom_call.1} parent=1 // pred_check
      _
    $region31: #{tpu_custom_call.1} parent=1 // pred_check_branch
      %72 = sbr.rel (0) target = $region33
    $region32: #{tpu_custom_call.1} parent=1 // pred_region
      _
    $region33: #{tpu_custom_call.1} parent=1 // pred_fallthru
      _
    // Predicated region
    $region34: #{tpu_custom_call.1} parent=1 // pred_check
      _
    $region35: #{tpu_custom_call.1} parent=1 // pred_check_branch
      %74 = sbr.rel (0) target = $region37
    $region36: #{tpu_custom_call.1} parent=1 // pred_region
      %75 = dma.done [#allocation3], 2048
    $region37: #{tpu_custom_call.1} parent=1 // pred_fallthru
      _
    // Predicated region
    $region38: #{tpu_custom_call.1} parent=1 // pred_check
      _
    $region39: #{tpu_custom_call.1} parent=1 // pred_check_branch
      %77 = sbr.rel (0) target = $region41
    $region40: #{tpu_custom_call.1} parent=1 // pred_region
      %78 = dma.done [#allocation6], 2048
    $region41: #{tpu_custom_call.1} parent=1 // pred_fallthru
      _
    // Predicated region
    $region42: #{tpu_custom_call.1} parent=1 // pred_check
      _
    $region43: #{tpu_custom_call.1} parent=1 // pred_check_branch
      %80 = sbr.rel (0) target = $region45
    $region44: #{tpu_custom_call.1} parent=1 // pred_region
      %81 = dma.done [#allocation6], 2048
    $region45: #{tpu_custom_call.1} parent=1 // pred_fallthru
      _
    // Predicated region
    $region46: #{tpu_custom_call.1} parent=1 // pred_check
      _
    $region47: #{tpu_custom_call.1} parent=1 // pred_check_branch
      %83 = sbr.rel (0) target = $region49
    $region48: #{tpu_custom_call.1} parent=1 // pred_region
      %84 = dma.done [#allocation9], 2048
    $region49: #{tpu_custom_call.1} parent=1 // pred_fallthru
      _
    %v85 = vld [vmem:[%s0] sm:$0xff]
    %v86 = vld [vmem:[%s0 + $0x8] sm:$0xff]
    %v87 = vld [vmem:[%s1] sm:$0x1]
    %88 = vset.pattern.permute.xlu0 0
    %89 = vperm.xlu0 %88, %v85
    %v90 = vpop.permute.xlu0 %89
    %92 = vset.pattern.permute.xlu0 0
    %93 = vperm.xlu0 %92, %v86
    %v94 = vpop.permute.xlu0 %93
    %v97 = vlaneseq
    %v98 = vshrl.u32 %v97, 7
    %v99 = vsub.s32 0, %v98
    %v100 = vrot.slane %v87, %v99
    %v102 = vsub.f32 %v90, %v100
    %v103 = vsub.f32 %v94, %v100
    %v104 = vmul.f32 %v102, -13.347223
    %v105 = vmul.f32 %v103, -13.347223
    %v106 = vmul.f32 %v104, %v102
    %v107 = vmul.f32 %v105, %v103
    %v108 = vmul.f32 %v106, 1.442695
    %v109 = vpow.pop %v108
    %v110 = vmul.f32 %v107, 1.442695
    %v111 = vpow.pop %v110
    %v112 = vlaneseq
    %v113 = vand.u32 %v112, 127
    %114 = vset.pattern.permute.xlu0 1
    %115 = vperm.xlu0 %114, %v85
    %v116 = vpop.permute.xlu0 %115
    %117 = vset.pattern.permute.xlu0 1
    %118 = vperm.xlu0 %117, %v86
    %v119 = vpop.permute.xlu0 %118
    %vm120 = vcmp.eq.s32.totalorder %v113, %v116
    %vm121 = vcmp.eq.s32.totalorder %v113, %v119
    %v122 = vsel %vm120, 1, 0
    %v123 = vsel %vm121, 1, 0
    %v124 = vcvt.s32.f32 %v122
    %v125 = vcvt.s32.f32 %v123
    %126 = vset.pattern.permute.xlu0 2
    %127 = vperm.xlu0 %126, %v85
    %v128 = vpop.permute.xlu0 %127
    %129 = vset.pattern.permute.xlu0 2
    %130 = vperm.xlu0 %129, %v86
    %v131 = vpop.permute.xlu0 %130
    %vm132 = vcmp.eq.s32.totalorder %v113, %v128
    %vm133 = vcmp.eq.s32.totalorder %v113, %v131
    %v134 = vsel %vm132, 1, 0
    %v135 = vsel %vm133, 1, 0
    %v136 = vcvt.s32.f32 %v134
    %v137 = vcvt.s32.f32 %v135
    %v138 = vld [vmem:[#allocation2] sm:$0xff]
    %v139 = vld [vmem:[#allocation2 + $0x8] sm:$0xff]
    %v140 = vld [vmem:[#allocation2 + $0x10] sm:$0xff]
    %v141 = vld [vmem:[#allocation2 + $0x18] sm:$0xff]
    %v142 = vld [vmem:[#allocation2 + $0x20] sm:$0xff]
    %v143 = vld [vmem:[#allocation2 + $0x28] sm:$0xff]
    %v144 = vld [vmem:[#allocation2 + $0x30] sm:$0xff]
    %v145 = vld [vmem:[#allocation2 + $0x38] sm:$0xff]
    %v146 = vld [vmem:[#allocation2 + $0x40] sm:$0xff]
    %v147 = vld [vmem:[#allocation2 + $0x48] sm:$0xff]
    %v148 = vld [vmem:[#allocation2 + $0x50] sm:$0xff]
    %v149 = vld [vmem:[#allocation2 + $0x58] sm:$0xff]
    %v150 = vld [vmem:[#allocation2 + $0x60] sm:$0xff]
    %v151 = vld [vmem:[#allocation2 + $0x68] sm:$0xff]
    %v152 = vld [vmem:[#allocation2 + $0x70] sm:$0xff]
    %v153 = vld [vmem:[#allocation2 + $0x78] sm:$0xff]
    %v154 = vld [vmem:[#allocation5] sm:$0xff]
    %v155 = vld [vmem:[#allocation5 + $0x8] sm:$0xff]
    %v156 = vld [vmem:[#allocation5 + $0x10] sm:$0xff]
    %v157 = vld [vmem:[#allocation5 + $0x18] sm:$0xff]
    %v158 = vld [vmem:[#allocation5 + $0x20] sm:$0xff]
    %v159 = vld [vmem:[#allocation5 + $0x28] sm:$0xff]
    %v160 = vld [vmem:[#allocation5 + $0x30] sm:$0xff]
    %v161 = vld [vmem:[#allocation5 + $0x38] sm:$0xff]
    %v162 = vld [vmem:[#allocation5 + $0x40] sm:$0xff]
    %v163 = vld [vmem:[#allocation5 + $0x48] sm:$0xff]
    %v164 = vld [vmem:[#allocation5 + $0x50] sm:$0xff]
    %v165 = vld [vmem:[#allocation5 + $0x58] sm:$0xff]
    %v166 = vld [vmem:[#allocation5 + $0x60] sm:$0xff]
    %v167 = vld [vmem:[#allocation5 + $0x68] sm:$0xff]
    %v168 = vld [vmem:[#allocation5 + $0x70] sm:$0xff]
    %v169 = vld [vmem:[#allocation5 + $0x78] sm:$0xff]
    %170 = vmatprep.subr.mxu0 0.0
    %171 = vmatpush1.msra.mxu0 %v154
    %172 = vmatprep.subr.mxu0 0.0
    %173 = vmatpush1.msra.mxu0 %v155
    %174 = vmatprep.subr.mxu0 0.0
    %175 = vmatpush1.msra.mxu0 %v156
    %176 = vmatprep.subr.mxu0 0.0
    %177 = vmatpush1.msra.mxu0 %v157
    %178 = vmatprep.subr.mxu0 0.0
    %179 = vmatpush1.msra.mxu0 %v158
    %180 = vmatprep.subr.mxu0 0.0
    %181 = vmatpush1.msra.mxu0 %v159
    %182 = vmatprep.subr.mxu0 0.0
    %183 = vmatpush1.msra.mxu0 %v160
    %184 = vmatprep.subr.mxu0 0.0
    %185 = vmatpush1.msra.mxu0 %v161
    %186 = vmatprep.subr.mxu0 0.0
    %187 = vmatpush1.msra.mxu0 %v162
    %188 = vmatprep.subr.mxu0 0.0
    %189 = vmatpush1.msra.mxu0 %v163
    %190 = vmatprep.subr.mxu0 0.0
    %191 = vmatpush1.msra.mxu0 %v164
    %192 = vmatprep.subr.mxu0 0.0
    %193 = vmatpush1.msra.mxu0 %v165
    %194 = vmatprep.subr.mxu0 0.0
    %195 = vmatpush1.msra.mxu0 %v166
    %196 = vmatprep.subr.mxu0 0.0
    %197 = vmatpush1.msra.mxu0 %v167
    %198 = vmatprep.subr.mxu0 0.0
    %199 = vmatpush1.msra.mxu0 %v168
    %200 = vmatprep.subr.mxu0 0.0
    %201 = vmatpush1.msra.mxu0 %v169
    %202 = vmatprep.subr.mxu0 0.0
    %203 = vmatpush1.msra.mxu0 0.0
    %204 = vmatprep.subr.mxu0 0.0
    %205 = vmatpush1.msra.mxu0 0.0
    %206 = vmatprep.subr.mxu0 0.0
    %207 = vmatpush1.msra.mxu0 0.0
    %208 = vmatprep.subr.mxu0 0.0
    %209 = vmatpush1.msra.mxu0 0.0
    %210 = vmatprep.subr.mxu0 0.0
    %211 = vmatpush1.msra.mxu0 0.0
    %212 = vmatprep.subr.mxu0 0.0
    %213 = vmatpush1.msra.mxu0 0.0
    %214 = vmatprep.subr.mxu0 0.0
    %215 = vmatpush1.msra.mxu0 0.0
    %216 = vmatprep.subr.mxu0 0.0
    %217 = vmatpush1.msra.mxu0 0.0
    %218 = vmatprep.subr.mxu0 0.0
    %219 = vmatpush1.msra.mxu0 0.0
    %220 = vmatprep.subr.mxu0 0.0
    %221 = vmatpush1.msra.mxu0 0.0
    %222 = vmatprep.subr.mxu0 0.0
    %223 = vmatpush1.msra.mxu0 0.0
    %224 = vmatprep.subr.mxu0 0.0
    %225 = vmatpush1.msra.mxu0 0.0
    %226 = vmatprep.subr.mxu0 0.0
    %227 = vmatpush1.msra.mxu0 0.0
    %228 = vmatprep.subr.mxu0 0.0
    %229 = vmatpush1.msra.mxu0 0.0
    %230 = vmatprep.subr.mxu0 0.0
    %231 = vmatpush1.msra.mxu0 0.0
    %232 = vmatprep.subr.mxu0 0.0
    %233 = vmatpush1.msra.mxu0 0.0
    %234 = vmatprep.mubr.f32.mxu0 0.0
    %235 = vmatmul.mubr.f32.gmra.mrb[0].mxu0 %v124
    %v236 = vpop.f32.mrb[0].mxu0
    %v237 = vadd.f32 0.0, %v236
    %v238 = vpop.f32.mrb[0].mxu0
    %239 = vmatprep.mubr.f32.mxu0 0.0
    %240 = vmatmul.mubr.f32.gmra.mrb[0].mxu0 %v125
    %v241 = vpop.f32.mrb[0].mxu0
    %v242 = vadd.f32 0.0, %v241
    %v243 = vpop.f32.mrb[0].mxu0
    %244 = vdwg.mxu0
    %245 = vmatprep.subr.mxu0 0.0
    %246 = vmatpush1.msra.mxu0 %v138
    %247 = vmatprep.subr.mxu0 0.0
    %248 = vmatpush1.msra.mxu0 %v139
    %249 = vmatprep.subr.mxu0 0.0
    %250 = vmatpush1.msra.mxu0 %v140
    %251 = vmatprep.subr.mxu0 0.0
    %252 = vmatpush1.msra.mxu0 %v141
    %253 = vmatprep.subr.mxu0 0.0
    %254 = vmatpush1.msra.mxu0 %v142
    %255 = vmatprep.subr.mxu0 0.0
    %256 = vmatpush1.msra.mxu0 %v143
    %257 = vmatprep.subr.mxu0 0.0
    %258 = vmatpush1.msra.mxu0 %v144
    %259 = vmatprep.subr.mxu0 0.0
    %260 = vmatpush1.msra.mxu0 %v145
    %261 = vmatprep.subr.mxu0 0.0
    %262 = vmatpush1.msra.mxu0 %v146
    %263 = vmatprep.subr.mxu0 0.0
    %264 = vmatpush1.msra.mxu0 %v147
    %265 = vmatprep.subr.mxu0 0.0
    %266 = vmatpush1.msra.mxu0 %v148
    %267 = vmatprep.subr.mxu0 0.0
    %268 = vmatpush1.msra.mxu0 %v149
    %269 = vmatprep.subr.mxu0 0.0
    %270 = vmatpush1.msra.mxu0 %v150
    %271 = vmatprep.subr.mxu0 0.0
    %272 = vmatpush1.msra.mxu0 %v151
    %273 = vmatprep.subr.mxu0 0.0
    %274 = vmatpush1.msra.mxu0 %v152
    %275 = vmatprep.subr.mxu0 0.0
    %276 = vmatpush1.msra.mxu0 %v153
    %277 = vmatprep.subr.mxu0 0.0
    %278 = vmatpush1.msra.mxu0 0.0
    %279 = vmatprep.subr.mxu0 0.0
    %280 = vmatpush1.msra.mxu0 0.0
    %281 = vmatprep.subr.mxu0 0.0
    %282 = vmatpush1.msra.mxu0 0.0
    %283 = vmatprep.subr.mxu0 0.0
    %284 = vmatpush1.msra.mxu0 0.0
    %285 = vmatprep.subr.mxu0 0.0
    %286 = vmatpush1.msra.mxu0 0.0
    %287 = vmatprep.subr.mxu0 0.0
    %288 = vmatpush1.msra.mxu0 0.0
    %289 = vmatprep.subr.mxu0 0.0
    %290 = vmatpush1.msra.mxu0 0.0
    %291 = vmatprep.subr.mxu0 0.0
    %292 = vmatpush1.msra.mxu0 0.0
    %293 = vmatprep.subr.mxu0 0.0
    %294 = vmatpush1.msra.mxu0 0.0
    %295 = vmatprep.subr.mxu0 0.0
    %296 = vmatpush1.msra.mxu0 0.0
    %297 = vmatprep.subr.mxu0 0.0
    %298 = vmatpush1.msra.mxu0 0.0
    %299 = vmatprep.subr.mxu0 0.0
    %300 = vmatpush1.msra.mxu0 0.0
    %301 = vmatprep.subr.mxu0 0.0
    %302 = vmatpush1.msra.mxu0 0.0
    %303 = vmatprep.subr.mxu0 0.0
    %304 = vmatpush1.msra.mxu0 0.0
    %305 = vmatprep.subr.mxu0 0.0
    %306 = vmatpush1.msra.mxu0 0.0
    %307 = vmatprep.subr.mxu0 0.0
    %308 = vmatpush1.msra.mxu0 0.0
    %309 = vmatprep.mubr.f32.mxu0 0.0
    %310 = vmatmul.mubr.f32.gmra.mrb[0].mxu0 %v109
    %v311 = vpop.f32.mrb[0].mxu0
    %v312 = vadd.f32 %v237, %v311
    %v313 = vpop.f32.mrb[0].mxu0
    %314 = vmatprep.mubr.f32.mxu0 0.0
    %315 = vmatmul.mubr.f32.gmra.mrb[0].mxu0 %v111
    %v316 = vpop.f32.mrb[0].mxu0
    %v317 = vadd.f32 %v242, %v316
    %v318 = vpop.f32.mrb[0].mxu0
    %319 = vdwg.mxu0
    %v320 = vld [vmem:[#allocation7] sm:$0xff]
    %v321 = vld [vmem:[#allocation7 + $0x8] sm:$0xff]
    %v322 = vld [vmem:[#allocation7 + $0x10] sm:$0xff]
    %v323 = vld [vmem:[#allocation7 + $0x18] sm:$0xff]
    %v324 = vld [vmem:[#allocation7 + $0x20] sm:$0xff]
    %v325 = vld [vmem:[#allocation7 + $0x28] sm:$0xff]
    %v326 = vld [vmem:[#allocation7 + $0x30] sm:$0xff]
    %v327 = vld [vmem:[#allocation7 + $0x38] sm:$0xff]
    %v328 = vld [vmem:[#allocation7 + $0x40] sm:$0xff]
    %v329 = vld [vmem:[#allocation7 + $0x48] sm:$0xff]
    %v330 = vld [vmem:[#allocation7 + $0x50] sm:$0xff]
    %v331 = vld [vmem:[#allocation7 + $0x58] sm:$0xff]
    %v332 = vld [vmem:[#allocation7 + $0x60] sm:$0xff]
    %v333 = vld [vmem:[#allocation7 + $0x68] sm:$0xff]
    %v334 = vld [vmem:[#allocation7 + $0x70] sm:$0xff]
    %v335 = vld [vmem:[#allocation7 + $0x78] sm:$0xff]
    %336 = vmatprep.subr.mxu0 0.0
    %337 = vmatpush1.msra.mxu0 %v320
    %338 = vmatprep.subr.mxu0 0.0
    %339 = vmatpush1.msra.mxu0 %v321
    %340 = vmatprep.subr.mxu0 0.0
    %341 = vmatpush1.msra.mxu0 %v322
    %342 = vmatprep.subr.mxu0 0.0
    %343 = vmatpush1.msra.mxu0 %v323
    %344 = vmatprep.subr.mxu0 0.0
    %345 = vmatpush1.msra.mxu0 %v324
    %346 = vmatprep.subr.mxu0 0.0
    %347 = vmatpush1.msra.mxu0 %v325
    %348 = vmatprep.subr.mxu0 0.0
    %349 = vmatpush1.msra.mxu0 %v326
    %350 = vmatprep.subr.mxu0 0.0
    %351 = vmatpush1.msra.mxu0 %v327
    %352 = vmatprep.subr.mxu0 0.0
    %353 = vmatpush1.msra.mxu0 %v328
    %354 = vmatprep.subr.mxu0 0.0
    %355 = vmatpush1.msra.mxu0 %v329
    %356 = vmatprep.subr.mxu0 0.0
    %357 = vmatpush1.msra.mxu0 %v330
    %358 = vmatprep.subr.mxu0 0.0
    %359 = vmatpush1.msra.mxu0 %v331
    %360 = vmatprep.subr.mxu0 0.0
    %361 = vmatpush1.msra.mxu0 %v332
    %362 = vmatprep.subr.mxu0 0.0
    %363 = vmatpush1.msra.mxu0 %v333
    %364 = vmatprep.subr.mxu0 0.0
    %365 = vmatpush1.msra.mxu0 %v334
    %366 = vmatprep.subr.mxu0 0.0
    %367 = vmatpush1.msra.mxu0 %v335
    %368 = vmatprep.subr.mxu0 0.0
    %369 = vmatpush1.msra.mxu0 0.0
    %370 = vmatprep.subr.mxu0 0.0
    %371 = vmatpush1.msra.mxu0 0.0
    %372 = vmatprep.subr.mxu0 0.0
    %373 = vmatpush1.msra.mxu0 0.0
    %374 = vmatprep.subr.mxu0 0.0
    %375 = vmatpush1.msra.mxu0 0.0
    %376 = vmatprep.subr.mxu0 0.0
    %377 = vmatpush1.msra.mxu0 0.0
    %378 = vmatprep.subr.mxu0 0.0
    %379 = vmatpush1.msra.mxu0 0.0
    %380 = vmatprep.subr.mxu0 0.0
    %381 = vmatpush1.msra.mxu0 0.0
    %382 = vmatprep.subr.mxu0 0.0
    %383 = vmatpush1.msra.mxu0 0.0
    %384 = vmatprep.subr.mxu0 0.0
    %385 = vmatpush1.msra.mxu0 0.0
    %386 = vmatprep.subr.mxu0 0.0
    %387 = vmatpush1.msra.mxu0 0.0
    %388 = vmatprep.subr.mxu0 0.0
    %389 = vmatpush1.msra.mxu0 0.0
    %390 = vmatprep.subr.mxu0 0.0
    %391 = vmatpush1.msra.mxu0 0.0
    %392 = vmatprep.subr.mxu0 0.0
    %393 = vmatpush1.msra.mxu0 0.0
    %394 = vmatprep.subr.mxu0 0.0
    %395 = vmatpush1.msra.mxu0 0.0
    %396 = vmatprep.subr.mxu0 0.0
    %397 = vmatpush1.msra.mxu0 0.0
    %398 = vmatprep.subr.mxu0 0.0
    %399 = vmatpush1.msra.mxu0 0.0
    %400 = vmatprep.mubr.f32.mxu0 0.0
    %401 = vmatmul.mubr.f32.gmra.mrb[0].mxu0 %v136
    %v402 = vpop.f32.mrb[0].mxu0
    %v403 = vadd.f32 0.0, %v402
    %v404 = vpop.f32.mrb[0].mxu0
    %405 = vmatprep.mubr.f32.mxu0 0.0
    %406 = vmatmul.mubr.f32.gmra.mrb[0].mxu0 %v137
    %v407 = vpop.f32.mrb[0].mxu0
    %v408 = vadd.f32 0.0, %v407
    %v409 = vpop.f32.mrb[0].mxu0
    %410 = vdwg.mxu0
    %v411 = vadd.f32 %v312, %v403
    %v412 = vadd.f32 %v317, %v408
    %v413 = vld [vmem:[%s3] sm:$0x1]
    %v415 = vlaneseq
    %v416 = vshrl.u32 %v415, 7
    %v417 = vsub.s32 0, %v416
    %v418 = vrot.slane %v413, %v417
    %v420 = vadd.f32 %v411, %v418
    %v421 = vadd.f32 %v412, %v418
    %v422 = vxor.u32 %v420, 2147483648
    %v423 = vxor.u32 %v421, 2147483648
    %v424 = vmul.f32 %v422, 1.442695
    %v425 = vpow.pop %v424
    %v426 = vmul.f32 %v423, 1.442695
    %v427 = vpow.pop %v426
    %v428 = vadd.f32 %v425, 1.0
    %v429 = vadd.f32 %v427, 1.0
    %v430 = vrcp.pop %v428
    %v431 = vmul.f32 1.0, %v430
    %v432 = vrcp.pop %v429
    %v433 = vmul.f32 1.0, %v432
    %v434 = vmul.f32 %v420, %v431
    %v435 = vmul.f32 %v421, %v433
    %v436 = vld [vmem:[#allocation8] sm:$0xff]
    %v437 = vld [vmem:[#allocation8 + $0x8] sm:$0xff]
    %v438 = vld [vmem:[#allocation8 + $0x10] sm:$0xff]
    %v439 = vld [vmem:[#allocation8 + $0x18] sm:$0xff]
    %v440 = vld [vmem:[#allocation8 + $0x20] sm:$0xff]
    %v441 = vld [vmem:[#allocation8 + $0x28] sm:$0xff]
    %v442 = vld [vmem:[#allocation8 + $0x30] sm:$0xff]
    %v443 = vld [vmem:[#allocation8 + $0x38] sm:$0xff]
    %v444 = vld [vmem:[#allocation8 + $0x40] sm:$0xff]
    %v445 = vld [vmem:[#allocation8 + $0x48] sm:$0xff]
    %v446 = vld [vmem:[#allocation8 + $0x50] sm:$0xff]
    %v447 = vld [vmem:[#allocation8 + $0x58] sm:$0xff]
    %v448 = vld [vmem:[#allocation8 + $0x60] sm:$0xff]
    %v449 = vld [vmem:[#allocation8 + $0x68] sm:$0xff]
    %v450 = vld [vmem:[#allocation8 + $0x70] sm:$0xff]
    %v451 = vld [vmem:[#allocation8 + $0x78] sm:$0xff]
    %v452 = vld [vmem:[%s7] sm:$0x1]
    %v454 = vlaneseq
    %v455 = vshrl.u32 %v454, 7
    %v456 = vsub.s32 0, %v455
    %v457 = vrot.slane %v452, %v456
    %459 = vmatprep.subr.mxu0 0.0
    %460 = vmatpush1.msra.mxu0 %v436
    %461 = vmatprep.subr.mxu0 0.0
    %462 = vmatpush1.msra.mxu0 %v437
    %463 = vmatprep.subr.mxu0 0.0
    %464 = vmatpush1.msra.mxu0 %v438
    %465 = vmatprep.subr.mxu0 0.0
    %466 = vmatpush1.msra.mxu0 %v439
    %467 = vmatprep.subr.mxu0 0.0
    %468 = vmatpush1.msra.mxu0 %v440
    %469 = vmatprep.subr.mxu0 0.0
    %470 = vmatpush1.msra.mxu0 %v441
    %471 = vmatprep.subr.mxu0 0.0
    %472 = vmatpush1.msra.mxu0 %v442
    %473 = vmatprep.subr.mxu0 0.0
    %474 = vmatpush1.msra.mxu0 %v443
    %475 = vmatprep.subr.mxu0 0.0
    %476 = vmatpush1.msra.mxu0 %v444
    %477 = vmatprep.subr.mxu0 0.0
    %478 = vmatpush1.msra.mxu0 %v445
    %479 = vmatprep.subr.mxu0 0.0
    %480 = vmatpush1.msra.mxu0 %v446
    %481 = vmatprep.subr.mxu0 0.0
    %482 = vmatpush1.msra.mxu0 %v447
    %483 = vmatprep.subr.mxu0 0.0
    %484 = vmatpush1.msra.mxu0 %v448
    %485 = vmatprep.subr.mxu0 0.0
    %486 = vmatpush1.msra.mxu0 %v449
    %487 = vmatprep.subr.mxu0 0.0
    %488 = vmatpush1.msra.mxu0 %v450
    %489 = vmatprep.subr.mxu0 0.0
    %490 = vmatpush1.msra.mxu0 %v451
    %491 = vmatprep.subr.mxu0 0.0
    %492 = vmatpush1.msra.mxu0 0.0
    %493 = vmatprep.subr.mxu0 0.0
    %494 = vmatpush1.msra.mxu0 0.0
    %495 = vmatprep.subr.mxu0 0.0
    %496 = vmatpush1.msra.mxu0 0.0
    %497 = vmatprep.subr.mxu0 0.0
    %498 = vmatpush1.msra.mxu0 0.0
    %499 = vmatprep.subr.mxu0 0.0
    %500 = vmatpush1.msra.mxu0 0.0
    %501 = vmatprep.subr.mxu0 0.0
    %502 = vmatpush1.msra.mxu0 0.0
    %503 = vmatprep.subr.mxu0 0.0
    %504 = vmatpush1.msra.mxu0 0.0
    %505 = vmatprep.subr.mxu0 0.0
    %506 = vmatpush1.msra.mxu0 0.0
    %507 = vmatprep.subr.mxu0 0.0
    %508 = vmatpush1.msra.mxu0 0.0
    %509 = vmatprep.subr.mxu0 0.0
    %510 = vmatpush1.msra.mxu0 0.0
    %511 = vmatprep.subr.mxu0 0.0
    %512 = vmatpush1.msra.mxu0 0.0
    %513 = vmatprep.subr.mxu0 0.0
    %514 = vmatpush1.msra.mxu0 0.0
    %515 = vmatprep.subr.mxu0 0.0
    %516 = vmatpush1.msra.mxu0 0.0
    %517 = vmatprep.subr.mxu0 0.0
    %518 = vmatpush1.msra.mxu0 0.0
    %519 = vmatprep.subr.mxu0 0.0
    %520 = vmatpush1.msra.mxu0 0.0
    %521 = vmatprep.subr.mxu0 0.0
    %522 = vmatpush1.msra.mxu0 0.0
    %523 = vmatprep.mubr.f32.mxu0 0.0
    %524 = vmatmul.mubr.f32.gmra.mrb[0].mxu0 %v434
    %v525 = vpop.f32.mrb[0].mxu0
    %v526 = vadd.f32 %v457, %v525
    %v527 = vpop.f32.mrb[0].mxu0
    %528 = vmatprep.mubr.f32.mxu0 0.0
    %529 = vmatmul.mubr.f32.gmra.mrb[0].mxu0 %v435
    %v530 = vpop.f32.mrb[0].mxu0
    %v531 = vadd.f32 %v457, %v530
    %v532 = vpop.f32.mrb[0].mxu0
    %533 = vdwg.mxu0
    %v534 = vxor.u32 %v526, 2147483648
    %v535 = vxor.u32 %v531, 2147483648
    %v536 = vmul.f32 %v534, 1.442695
    %v537 = vpow.pop %v536
    %v538 = vmul.f32 %v535, 1.442695
    %v539 = vpow.pop %v538
    %v540 = vadd.f32 %v537, 1.0
    %v541 = vadd.f32 %v539, 1.0
    %v542 = vrcp.pop %v540
    %v543 = vmul.f32 1.0, %v542
    %v544 = vrcp.pop %v541
    %v545 = vmul.f32 1.0, %v544
    %v546 = vmul.f32 %v526, %v543
    %v547 = vmul.f32 %v531, %v545
    %548 = vst [vmem:[#allocation10] sm:$0xff] %v546
    %549 = vst [vmem:[#allocation10 + $0x8] sm:$0xff] %v547
    // Predicated region
    $region50: #{tpu_custom_call.1} parent=1 // pred_check
      _
    $region51: #{tpu_custom_call.1} parent=1 // pred_check_branch
      %551 = sbr.rel (0) target = $region53
    $region52: #{tpu_custom_call.1} parent=1 // pred_region
      %s553 = ssub.s32 256, 256
      %554 = vsyncadd [#allocation4], %s553
      %s555 = sshll.u32 [#allocation10], 4
      %s556 = int_to_ptr.vmem [resolvable:$true] %s555
      %561 = dma.vmem_to_hbm [thread:$0]  %s556, 256, %s8, [#allocation4], 128, 128, 8
    $region53: #{tpu_custom_call.1} parent=1 // pred_fallthru
      _
    // Predicated region
    $region54: #{tpu_custom_call.1} parent=1 // pred_check
      _
    $region55: #{tpu_custom_call.1} parent=1 // pred_check_branch
      %563 = sbr.rel (0) target = $region57
    $region56: #{tpu_custom_call.1} parent=1 // pred_region
      %564 = dma.done [#allocation4], 256
    $region57: #{tpu_custom_call.1} parent=1 // pred_fallthru
      _
    %565 = vsyncpa [#allocation3], 1
    %566 = vsyncpa [#allocation6], 1
    %567 = vsyncpa [#allocation9], 1
    %568 = vsyncpa [#allocation4], 1

</llo_original>
